<compile_context>
chip_gen: v7x
topology: tpu7x:2x2x1
jax: 0.10.0
libtpu: 0.0.40
codegen_flags: <defaults>
</compile_context>

<pallas_src>
import jax
import jax.numpy as jnp
from jax.experimental import pallas as pl
from jax.experimental.pallas import tpu as pltpu

HP = 128   # hidden dim padded 100 -> 128 (contraction dim of layer 2)
AP = 8     # action dim padded n_actions -> 8 (sublane dim of the output)


def _agent_mlp_kernel(xt_ref, w1t_ref, b1_ref, w2t_ref, b2_ref, o_ref):
    # xt : [2, TB]    (batch on lanes -> lane-dense)
    # w1t: [HP, 2]    b1: [HP, 1]    w2t: [AP, HP]    b2: [AP, 1]
    xt = xt_ref[...]
    w1t = w1t_ref[...]
    # Layer 1 on the VPU: K=2 contraction as two broadcasted FMAs.
    h = (w1t[:, 0:1] * xt[0:1, :]
         + w1t[:, 1:2] * xt[1:2, :]
         + b1_ref[...])                                    # [HP, TB]
    h = jnp.maximum(h, 0.0)                                # ReLU
    # Layer 2 on the MXU in the transposed frame: [AP, HP] @ [HP, TB].
    q = jnp.dot(w2t_ref[...], h, preferred_element_type=jnp.float32)
    o_ref[...] = (q + b2_ref[...]).astype(o_ref.dtype)


def prep_params(w1, b1, w2, b2):
    """Pad + transpose parameters ONCE (call at init / whenever params change).

    w1: [2, H], b1: [H], w2: [H, A], b2: [A]  ->  kernel-ready padded tensors.
    Padded entries MUST stay zero so padded hidden/action slots contribute 0.
    """
    H = w1.shape[1]
    A = w2.shape[1]
    w1t_p = jnp.zeros((HP, 2), jnp.float32).at[:H, :].set(w1.astype(jnp.float32).T)
    b1_p = jnp.zeros((HP, 1), jnp.float32).at[:H, 0].set(b1.astype(jnp.float32))
    w2t_p = jnp.zeros((AP, HP), jnp.float32).at[:A, :H].set(w2.astype(jnp.float32).T)
    b2_p = jnp.zeros((AP, 1), jnp.float32).at[:A, 0].set(b2.astype(jnp.float32))
    return w1t_p, b1_p, w2t_p, b2_p


def _round_up(n, m):
    return ((n + m - 1) // m) * m


def _pick_batch_tile(B):
    # Lane-dense tiles (multiple of 128).  For B > 128 aim for >= 2 grid
    # blocks so v7x's second TensorCore gets work; cap the tile at 2048 to
    # amortize the ~0.35 us per-grid-step overhead with tiny VMEM footprint.
    if B <= 128:
        return 128
    return min(2048, _round_up((B + 1) // 2, 128))


def agent_forward(x, padded_params, n_actions):
    """x: [B, 2] -> q-values [B, n_actions] == relu(x @ w1 + b1) @ w2 + b2."""
    w1t_p, b1_p, w2t_p, b2_p = padded_params
    B = x.shape[0]
    TB = _pick_batch_tile(B)
    Bp = _round_up(B, TB)

    x = x.astype(jnp.float32)
    if Bp == B:
        xt_p = x.T                                          # fast path: no pad copy
    else:
        xt_p = jnp.zeros((2, Bp), jnp.float32).at[:, :B].set(x.T)

    grid = (Bp // TB,)
    out_t = pl.pallas_call(
        _agent_mlp_kernel,
        out_shape=jax.ShapeDtypeStruct((AP, Bp), jnp.float32),
        grid_spec=pl.GridSpec(
            grid=grid,
            in_specs=[
                pl.BlockSpec((2, TB), lambda i: (0, i)),    # x^T tiled over batch lanes
                pl.BlockSpec((HP, 2), lambda i: (0, 0)),    # params stay VMEM-resident
                pl.BlockSpec((HP, 1), lambda i: (0, 0)),
                pl.BlockSpec((AP, HP), lambda i: (0, 0)),
                pl.BlockSpec((AP, 1), lambda i: (0, 0)),
            ],
            out_specs=pl.BlockSpec((AP, TB), lambda i: (0, i)),
        ),
        compiler_params=pltpu.CompilerParams(
            dimension_semantics=("parallel",)),             # megacore on v7x
    )(xt_p, w1t_p, b1_p, w2t_p, b2_p)

    return out_t[:n_actions, :B].T                          # tiny (8 x Bp) slice


def init_params(key, n_actions, hidden=100, in_dim=2):
    """Deterministic init mimicking PyTorch nn.Linear default (uniform +-1/sqrt(fan_in))."""
    k1, k2, k3, k4 = jax.random.split(key, 4)
    bound1 = 1.0 / jnp.sqrt(in_dim)
    bound2 = 1.0 / jnp.sqrt(hidden)
    w1 = jax.random.uniform(k1, (in_dim, hidden), jnp.float32, -bound1, bound1)
    b1 = jax.random.uniform(k2, (hidden,), jnp.float32, -bound1, bound1)
    w2 = jax.random.uniform(k3, (hidden, n_actions), jnp.float32, -bound2, bound2)
    b2 = jax.random.uniform(k4, (n_actions,), jnp.float32, -bound2, bound2)
    return w1, b1, w2, b2


if __name__ == "__main__":
    key = jax.random.PRNGKey(0)
    kx, kp = jax.random.split(key)

    n_actions = 3          # MountainCar has 3 discrete actions
    batch = 2
    x = jax.random.normal(kx, (batch, 2), dtype=jnp.float32)

    w1, b1, w2, b2 = init_params(kp, n_actions)
    padded_params = prep_params(w1, b1, w2, b2)   # padding hoisted out of forward

    fwd = jax.jit(agent_forward, static_argnums=(2,))

    out = jax.block_until_ready(fwd(x, padded_params, n_actions))

    # Plain-JAX reference check
    ref = jnp.maximum(x @ w1 + b1, 0.0) @ w2 + b2
    assert out.shape == (batch, n_actions)
    assert jnp.allclose(out, ref, atol=1e-5, rtol=1e-5)

    # Also exercise a "training batch" size to validate the multi-block grid path.
    big_B = 1000
    xb = jax.random.normal(jax.random.PRNGKey(7), (big_B, 2), dtype=jnp.float32)
    out_b = jax.block_until_ready(fwd(xb, padded_params, n_actions))
    ref_b = jnp.maximum(xb @ w1 + b1, 0.0) @ w2 + b2
    assert out_b.shape == (big_B, n_actions)
    assert jnp.allclose(out_b, ref_b, atol=1e-4, rtol=1e-4)

    # TODO(synk): select_action / get_q_value are host-side Python (RNG,
    # argmax.item(), gather) and are intentionally not kernelized.
    print("KERNEL_OK")
</pallas_src>

<mosaic_0001>
module attributes {stable_mosaic.version = 11 : i64} {
  func.func @_agent_mlp_kernel(%arg0: i32, %arg1: memref<2x128xf32, #tpu.memory_space<vmem>>, %arg2: memref<128x2xf32, #tpu.memory_space<vmem>>, %arg3: memref<128x1xf32, #tpu.memory_space<vmem>>, %arg4: memref<8x128xf32, #tpu.memory_space<vmem>>, %arg5: memref<8x1xf32, #tpu.memory_space<vmem>>, %arg6: memref<8x128xf32, #tpu.memory_space<vmem>>) attributes {dimension_semantics = [#tpu.dimension_semantics<parallel>], iteration_bounds = array<i64: 1>, scalar_prefetch = 0 : i64, scratch_operands = 0 : i64, tpu.core_type = #tpu.core_type<tc>, window_params = [{transform_indices = @transform_0, window_bounds = array<i64: 2, 128>}, {pipeline_mode = #tpu.pipeline_mode<synchronous>, transform_indices = @transform_1, window_bounds = array<i64: 128, 2>}, {pipeline_mode = #tpu.pipeline_mode<synchronous>, transform_indices = @transform_2, window_bounds = array<i64: 128, 1>}, {pipeline_mode = #tpu.pipeline_mode<synchronous>, transform_indices = @transform_3, window_bounds = array<i64: 8, 128>}, {pipeline_mode = #tpu.pipeline_mode<synchronous>, transform_indices = @transform_4, window_bounds = array<i64: 8, 1>}, {transform_indices = @transform_5, window_bounds = array<i64: 8, 128>}]} {
    %c0 = arith.constant 0 : index
    %c0_0 = arith.constant 0 : index
    %0 = vector.load %arg1[%c0, %c0_0] : memref<2x128xf32, #tpu.memory_space<vmem>>, vector<2x128xf32>
    %c0_1 = arith.constant 0 : index
    %c0_2 = arith.constant 0 : index
    %1 = vector.load %arg2[%c0_1, %c0_2] : memref<128x2xf32, #tpu.memory_space<vmem>>, vector<128x2xf32>
    %2 = vector.extract_strided_slice %1 {offsets = [0, 0], sizes = [128, 1], strides = [1, 1]} : vector<128x2xf32> to vector<128x1xf32>
    %3 = vector.extract_strided_slice %0 {offsets = [0, 0], sizes = [1, 128], strides = [1, 1]} : vector<2x128xf32> to vector<1x128xf32>
    %4 = vector.broadcast %2 : vector<128x1xf32> to vector<128x128xf32>
    %5 = vector.broadcast %3 : vector<1x128xf32> to vector<128x128xf32>
    %6 = arith.mulf %4, %5 : vector<128x128xf32>
    %7 = vector.extract_strided_slice %1 {offsets = [0, 1], sizes = [128, 1], strides = [1, 1]} : vector<128x2xf32> to vector<128x1xf32>
    %8 = vector.extract_strided_slice %0 {offsets = [1, 0], sizes = [1, 128], strides = [1, 1]} : vector<2x128xf32> to vector<1x128xf32>
    %9 = vector.broadcast %7 : vector<128x1xf32> to vector<128x128xf32>
    %10 = vector.broadcast %8 : vector<1x128xf32> to vector<128x128xf32>
    %11 = arith.mulf %9, %10 : vector<128x128xf32>
    %12 = arith.addf %6, %11 : vector<128x128xf32>
    %c0_3 = arith.constant 0 : index
    %c0_4 = arith.constant 0 : index
    %13 = vector.load %arg3[%c0_3, %c0_4] : memref<128x1xf32, #tpu.memory_space<vmem>>, vector<128x1xf32>
    %14 = vector.broadcast %13 : vector<128x1xf32> to vector<128x128xf32>
    %15 = arith.addf %12, %14 : vector<128x128xf32>
    %cst = arith.constant 0.000000e+00 : f32
    %16 = vector.broadcast %cst : f32 to vector<128x128xf32>
    %17 = arith.maximumf %15, %16 : vector<128x128xf32>
    %c0_5 = arith.constant 0 : index
    %c0_6 = arith.constant 0 : index
    %18 = vector.load %arg4[%c0_5, %c0_6] : memref<8x128xf32, #tpu.memory_space<vmem>>, vector<8x128xf32>
    %cst_7 = arith.constant dense<0.000000e+00> : vector<8x128xf32>
    %19 = tpu.matmul %18, %17, %cst_7 {dimension_numbers = #tpu.dot_dimension_numbers<[1], [0], [0], [1], [0, 0, 1, 1], [], []>} : vector<8x128xf32>, vector<128x128xf32>, vector<8x128xf32> -> vector<8x128xf32>
    %c0_8 = arith.constant 0 : index
    %c0_9 = arith.constant 0 : index
    %20 = vector.load %arg5[%c0_8, %c0_9] : memref<8x1xf32, #tpu.memory_space<vmem>>, vector<8x1xf32>
    %21 = vector.broadcast %20 : vector<8x1xf32> to vector<8x128xf32>
    %22 = arith.addf %19, %21 : vector<8x128xf32>
    %c0_10 = arith.constant 0 : index
    %c0_11 = arith.constant 0 : index
    %23 = vector.load %arg6[%c0_10, %c0_11] : memref<8x128xf32, #tpu.memory_space<vmem>>, vector<8x128xf32>
    tpu.vector_store %arg6[%c0_10, %c0_11], %22 {strides = array<i32>} : memref<8x128xf32, #tpu.memory_space<vmem>>, vector<8x128xf32>,
    return
  }
  func.func @transform_0(%arg0: i32) -> (i32, i32) {
    %c0_i32 = arith.constant 0 : i32
    %c0_i32_0 = arith.constant 0 : i32
    return %c0_i32, %arg0 : i32, i32
  }
  func.func @transform_1(%arg0: i32) -> (i32, i32) {
    %c0_i32 = arith.constant 0 : i32
    %c0_i32_0 = arith.constant 0 : i32
    %c0_i32_1 = arith.constant 0 : i32
    return %c0_i32, %c0_i32_0 : i32, i32
  }
  func.func @transform_2(%arg0: i32) -> (i32, i32) {
    %c0_i32 = arith.constant 0 : i32
    %c0_i32_0 = arith.constant 0 : i32
    %c0_i32_1 = arith.constant 0 : i32
    return %c0_i32, %c0_i32_0 : i32, i32
  }
  func.func @transform_3(%arg0: i32) -> (i32, i32) {
    %c0_i32 = arith.constant 0 : i32
    %c0_i32_0 = arith.constant 0 : i32
    %c0_i32_1 = arith.constant 0 : i32
    return %c0_i32, %c0_i32_0 : i32, i32
  }
  func.func @transform_4(%arg0: i32) -> (i32, i32) {
    %c0_i32 = arith.constant 0 : i32
    %c0_i32_0 = arith.constant 0 : i32
    %c0_i32_1 = arith.constant 0 : i32
    return %c0_i32, %c0_i32_0 : i32, i32
  }
  func.func @transform_5(%arg0: i32) -> (i32, i32) {
    %c0_i32 = arith.constant 0 : i32
    %c0_i32_0 = arith.constant 0 : i32
    return %c0_i32, %arg0 : i32, i32
  }
}

</mosaic_0001>

<llo_original>
// kernel: agent_forward.1
$region0: #{agent_forward.1}
  #allocation0 [shape = 'u32[]', space=smem, size = 0x4, offset = 0x4, fixed_abs, tag = 'smem constant byte address 0x4 - core index']
  #allocation1 [shape = 'u32[144,128]{1,0:T(1,128)}', space=vmem, size = 0x12000, scoped, tag = 'internal scratch']
  %s0 = inlined_call_operand.vmem [shape: f32[2,128], index: 0, kind: input, shape index: {}]
  %s1 = inlined_call_operand.vmem [shape: f32[128,2], index: 1, kind: input, shape index: {}]
  %s2 = inlined_call_operand.vmem [shape: f32[128,1], index: 2, kind: input, shape index: {}]
  %s3 = inlined_call_operand.vmem [shape: f32[8,128], index: 3, kind: input, shape index: {}]
  %s4 = inlined_call_operand.vmem [shape: f32[8,1], index: 4, kind: input, shape index: {}]
  %s5 = inlined_call_operand.vmem [shape: f32[8,128], index: 5, kind: output, shape index: {}]
  %s6 = sld [smem:[#allocation0]]
  $region30: #{agent_forward.1} parent=0
    _
  %s8 = ssub.s32 1, %s6
  %s9 = scalar_select 0, %s8, %s6
  // Predicated region
  $region2: #{agent_forward.1} parent=0 // pred_check
    _
  $region3: #{agent_forward.1} parent=0 // pred_check_branch
    %11 = sbr.rel (0) target = $region5
  $region4: #{agent_forward.1} parent=0 // pred_region
    _
  $region5: #{agent_forward.1} parent=0 // pred_fallthru
    _
  // Predicated region
  $region6: #{agent_forward.1} parent=0 // pred_check
    _
  $region7: #{agent_forward.1} parent=0 // pred_check_branch
    %13 = sbr.rel (0) target = $region9
  $region8: #{agent_forward.1} parent=0 // pred_region
    _
  $region9: #{agent_forward.1} parent=0 // pred_fallthru
    _
  // Predicated region
  $region10: #{agent_forward.1} parent=0 // pred_check
    _
  $region11: #{agent_forward.1} parent=0 // pred_check_branch
    %15 = sbr.rel (0) target = $region13
  $region12: #{agent_forward.1} parent=0 // pred_region
    _
  $region13: #{agent_forward.1} parent=0 // pred_fallthru
    _
  // Predicated region
  $region14: #{agent_forward.1} parent=0 // pred_check
    _
  $region15: #{agent_forward.1} parent=0 // pred_check_branch
    %17 = sbr.rel (0) target = $region17
  $region16: #{agent_forward.1} parent=0 // pred_region
    _
  $region17: #{agent_forward.1} parent=0 // pred_fallthru
    _
  // Predicated region
  $region18: #{agent_forward.1} parent=0 // pred_check
    _
  $region19: #{agent_forward.1} parent=0 // pred_check_branch
    %19 = sbr.rel (0) target = $region21
  $region20: #{agent_forward.1} parent=0 // pred_region
    _
  $region21: #{agent_forward.1} parent=0 // pred_fallthru
    _
  %v20 = vld [vmem:[%s0] sm:$0x3]
  %v21 = vld [vmem:[%s1] sm:$0xff]
  %v22 = vld [vmem:[%s1 + $0x8] sm:$0xff]
  %v23 = vld [vmem:[%s1 + $0x10] sm:$0xff]
  %v24 = vld [vmem:[%s1 + $0x18] sm:$0xff]
  %v25 = vld [vmem:[%s1 + $0x20] sm:$0xff]
  %v26 = vld [vmem:[%s1 + $0x28] sm:$0xff]
  %v27 = vld [vmem:[%s1 + $0x30] sm:$0xff]
  %v28 = vld [vmem:[%s1 + $0x38] sm:$0xff]
  %v29 = vld [vmem:[%s1 + $0x40] sm:$0xff]
  %v30 = vld [vmem:[%s1 + $0x48] sm:$0xff]
  %v31 = vld [vmem:[%s1 + $0x50] sm:$0xff]
  %v32 = vld [vmem:[%s1 + $0x58] sm:$0xff]
  %v33 = vld [vmem:[%s1 + $0x60] sm:$0xff]
  %v34 = vld [vmem:[%s1 + $0x68] sm:$0xff]
  %v35 = vld [vmem:[%s1 + $0x70] sm:$0xff]
  %v36 = vld [vmem:[%s1 + $0x78] sm:$0xff]
  %38 = vset.pattern.permute.xlu0 0
  %39 = vperm.xlu0 %38, %v21
  %v40 = vpop.permute.xlu0 %39
  %43 = vset.pattern.permute.xlu0 0
  %44 = vperm.xlu0 %43, %v22
  %v45 = vpop.permute.xlu0 %44
  %48 = vset.pattern.permute.xlu0 0
  %49 = vperm.xlu0 %48, %v23
  %v50 = vpop.permute.xlu0 %49
  %53 = vset.pattern.permute.xlu0 0
  %54 = vperm.xlu0 %53, %v24
  %v55 = vpop.permute.xlu0 %54
  %58 = vset.pattern.permute.xlu0 0
  %59 = vperm.xlu0 %58, %v25
  %v60 = vpop.permute.xlu0 %59
  %63 = vset.pattern.permute.xlu0 0
  %64 = vperm.xlu0 %63, %v26
  %v65 = vpop.permute.xlu0 %64
  %68 = vset.pattern.permute.xlu0 0
  %69 = vperm.xlu0 %68, %v27
  %v70 = vpop.permute.xlu0 %69
  %73 = vset.pattern.permute.xlu0 0
  %74 = vperm.xlu0 %73, %v28
  %v75 = vpop.permute.xlu0 %74
  %78 = vset.pattern.permute.xlu0 0
  %79 = vperm.xlu0 %78, %v29
  %v80 = vpop.permute.xlu0 %79
  %83 = vset.pattern.permute.xlu0 0
  %84 = vperm.xlu0 %83, %v30
  %v85 = vpop.permute.xlu0 %84
  %88 = vset.pattern.permute.xlu0 0
  %89 = vperm.xlu0 %88, %v31
  %v90 = vpop.permute.xlu0 %89
  %93 = vset.pattern.permute.xlu0 0
  %94 = vperm.xlu0 %93, %v32
  %v95 = vpop.permute.xlu0 %94
  %98 = vset.pattern.permute.xlu0 0
  %99 = vperm.xlu0 %98, %v33
  %v100 = vpop.permute.xlu0 %99
  %103 = vset.pattern.permute.xlu0 0
  %104 = vperm.xlu0 %103, %v34
  %v105 = vpop.permute.xlu0 %104
  %108 = vset.pattern.permute.xlu0 0
  %109 = vperm.xlu0 %108, %v35
  %v110 = vpop.permute.xlu0 %109
  %113 = vset.pattern.permute.xlu0 0
  %114 = vperm.xlu0 %113, %v36
  %v115 = vpop.permute.xlu0 %114
  %v117 = vlaneseq
  %v118 = vshrl.u32 %v117, 7
  %v119 = vsub.s32 0, %v118
  %v120 = vrot.slane %v20, %v119
  %v121 = vmul.f32 %v40, %v120
  %v122 = vmul.f32 %v45, %v120
  %v123 = vmul.f32 %v50, %v120
  %v124 = vmul.f32 %v55, %v120
  %v125 = vmul.f32 %v60, %v120
  %v126 = vmul.f32 %v65, %v120
  %v127 = vmul.f32 %v70, %v120
  %v128 = vmul.f32 %v75, %v120
  %v129 = vmul.f32 %v80, %v120
  %v130 = vmul.f32 %v85, %v120
  %v131 = vmul.f32 %v90, %v120
  %v132 = vmul.f32 %v95, %v120
  %v133 = vmul.f32 %v100, %v120
  %v134 = vmul.f32 %v105, %v120
  %v135 = vmul.f32 %v110, %v120
  %v136 = vmul.f32 %v115, %v120
  %137 = vset.pattern.permute.xlu0 1
  %138 = vperm.xlu0 %137, %v21
  %v139 = vpop.permute.xlu0 %138
  %141 = vset.pattern.permute.xlu0 1
  %142 = vperm.xlu0 %141, %v22
  %v143 = vpop.permute.xlu0 %142
  %145 = vset.pattern.permute.xlu0 1
  %146 = vperm.xlu0 %145, %v23
  %v147 = vpop.permute.xlu0 %146
  %149 = vset.pattern.permute.xlu0 1
  %150 = vperm.xlu0 %149, %v24
  %v151 = vpop.permute.xlu0 %150
  %153 = vset.pattern.permute.xlu0 1
  %154 = vperm.xlu0 %153, %v25
  %v155 = vpop.permute.xlu0 %154
  %157 = vset.pattern.permute.xlu0 1
  %158 = vperm.xlu0 %157, %v26
  %v159 = vpop.permute.xlu0 %158
  %161 = vset.pattern.permute.xlu0 1
  %162 = vperm.xlu0 %161, %v27
  %v163 = vpop.permute.xlu0 %162
  %165 = vset.pattern.permute.xlu0 1
  %166 = vperm.xlu0 %165, %v28
  %v167 = vpop.permute.xlu0 %166
  %169 = vset.pattern.permute.xlu0 1
  %170 = vperm.xlu0 %169, %v29
  %v171 = vpop.permute.xlu0 %170
  %173 = vset.pattern.permute.xlu0 1
  %174 = vperm.xlu0 %173, %v30
  %v175 = vpop.permute.xlu0 %174
  %177 = vset.pattern.permute.xlu0 1
  %178 = vperm.xlu0 %177, %v31
  %v179 = vpop.permute.xlu0 %178
  %181 = vset.pattern.permute.xlu0 1
  %182 = vperm.xlu0 %181, %v32
  %v183 = vpop.permute.xlu0 %182
  %185 = vset.pattern.permute.xlu0 1
  %186 = vperm.xlu0 %185, %v33
  %v187 = vpop.permute.xlu0 %186
  %189 = vset.pattern.permute.xlu0 1
  %190 = vperm.xlu0 %189, %v34
  %v191 = vpop.permute.xlu0 %190
  %193 = vset.pattern.permute.xlu0 1
  %194 = vperm.xlu0 %193, %v35
  %v195 = vpop.permute.xlu0 %194
  %197 = vset.pattern.permute.xlu0 1
  %198 = vperm.xlu0 %197, %v36
  %v199 = vpop.permute.xlu0 %198
  %v201 = vlaneseq
  %v202 = vshrl.u32 %v201, 7
  %v203 = vsub.s32 1, %v202
  %v204 = vrot.slane %v20, %v203
  %v205 = vmul.f32 %v139, %v204
  %v206 = vmul.f32 %v143, %v204
  %v207 = vmul.f32 %v147, %v204
  %v208 = vmul.f32 %v151, %v204
  %v209 = vmul.f32 %v155, %v204
  %v210 = vmul.f32 %v159, %v204
  %v211 = vmul.f32 %v163, %v204
  %v212 = vmul.f32 %v167, %v204
  %v213 = vmul.f32 %v171, %v204
  %v214 = vmul.f32 %v175, %v204
  %v215 = vmul.f32 %v179, %v204
  %v216 = vmul.f32 %v183, %v204
  %v217 = vmul.f32 %v187, %v204
  %v218 = vmul.f32 %v191, %v204
  %v219 = vmul.f32 %v195, %v204
  %v220 = vmul.f32 %v199, %v204
  %v221 = vadd.f32 %v121, %v205
  %v222 = vadd.f32 %v122, %v206
  %v223 = vadd.f32 %v123, %v207
  %v224 = vadd.f32 %v124, %v208
  %v225 = vadd.f32 %v125, %v209
  %v226 = vadd.f32 %v126, %v210
  %v227 = vadd.f32 %v127, %v211
  %v228 = vadd.f32 %v128, %v212
  %v229 = vadd.f32 %v129, %v213
  %v230 = vadd.f32 %v130, %v214
  %v231 = vadd.f32 %v131, %v215
  %v232 = vadd.f32 %v132, %v216
  %v233 = vadd.f32 %v133, %v217
  %v234 = vadd.f32 %v134, %v218
  %v235 = vadd.f32 %v135, %v219
  %v236 = vadd.f32 %v136, %v220
  %v237 = vld [vmem:[%s2] sm:$0xff]
  %v238 = vld [vmem:[%s2 + $0x8] sm:$0xff]
  %v239 = vld [vmem:[%s2 + $0x10] sm:$0xff]
  %v240 = vld [vmem:[%s2 + $0x18] sm:$0xff]
  %v241 = vld [vmem:[%s2 + $0x20] sm:$0xff]
  %v242 = vld [vmem:[%s2 + $0x28] sm:$0xff]
  %v243 = vld [vmem:[%s2 + $0x30] sm:$0xff]
  %v244 = vld [vmem:[%s2 + $0x38] sm:$0xff]
  %v245 = vld [vmem:[%s2 + $0x40] sm:$0xff]
  %v246 = vld [vmem:[%s2 + $0x48] sm:$0xff]
  %v247 = vld [vmem:[%s2 + $0x50] sm:$0xff]
  %v248 = vld [vmem:[%s2 + $0x58] sm:$0xff]
  %v249 = vld [vmem:[%s2 + $0x60] sm:$0xff]
  %v250 = vld [vmem:[%s2 + $0x68] sm:$0xff]
  %v251 = vld [vmem:[%s2 + $0x70] sm:$0xff]
  %v252 = vld [vmem:[%s2 + $0x78] sm:$0xff]
  %254 = vset.pattern.permute.xlu0 0
  %255 = vperm.xlu0 %254, %v237
  %v256 = vpop.permute.xlu0 %255
  %259 = vset.pattern.permute.xlu0 0
  %260 = vperm.xlu0 %259, %v238
  %v261 = vpop.permute.xlu0 %260
  %264 = vset.pattern.permute.xlu0 0
  %265 = vperm.xlu0 %264, %v239
  %v266 = vpop.permute.xlu0 %265
  %269 = vset.pattern.permute.xlu0 0
  %270 = vperm.xlu0 %269, %v240
  %v271 = vpop.permute.xlu0 %270
  %274 = vset.pattern.permute.xlu0 0
  %275 = vperm.xlu0 %274, %v241
  %v276 = vpop.permute.xlu0 %275
  %279 = vset.pattern.permute.xlu0 0
  %280 = vperm.xlu0 %279, %v242
  %v281 = vpop.permute.xlu0 %280
  %284 = vset.pattern.permute.xlu0 0
  %285 = vperm.xlu0 %284, %v243
  %v286 = vpop.permute.xlu0 %285
  %289 = vset.pattern.permute.xlu0 0
  %290 = vperm.xlu0 %289, %v244
  %v291 = vpop.permute.xlu0 %290
  %294 = vset.pattern.permute.xlu0 0
  %295 = vperm.xlu0 %294, %v245
  %v296 = vpop.permute.xlu0 %295
  %299 = vset.pattern.permute.xlu0 0
  %300 = vperm.xlu0 %299, %v246
  %v301 = vpop.permute.xlu0 %300
  %304 = vset.pattern.permute.xlu0 0
  %305 = vperm.xlu0 %304, %v247
  %v306 = vpop.permute.xlu0 %305
  %309 = vset.pattern.permute.xlu0 0
  %310 = vperm.xlu0 %309, %v248
  %v311 = vpop.permute.xlu0 %310
  %314 = vset.pattern.permute.xlu0 0
  %315 = vperm.xlu0 %314, %v249
  %v316 = vpop.permute.xlu0 %315
  %319 = vset.pattern.permute.xlu0 0
  %320 = vperm.xlu0 %319, %v250
  %v321 = vpop.permute.xlu0 %320
  %324 = vset.pattern.permute.xlu0 0
  %325 = vperm.xlu0 %324, %v251
  %v326 = vpop.permute.xlu0 %325
  %329 = vset.pattern.permute.xlu0 0
  %330 = vperm.xlu0 %329, %v252
  %v331 = vpop.permute.xlu0 %330
  %v333 = vadd.f32 %v221, %v256
  %v334 = vadd.f32 %v222, %v261
  %v335 = vadd.f32 %v223, %v266
  %v336 = vadd.f32 %v224, %v271
  %v337 = vadd.f32 %v225, %v276
  %v338 = vadd.f32 %v226, %v281
  %v339 = vadd.f32 %v227, %v286
  %v340 = vadd.f32 %v228, %v291
  %v341 = vadd.f32 %v229, %v296
  %v342 = vadd.f32 %v230, %v301
  %v343 = vadd.f32 %v231, %v306
  %v344 = vadd.f32 %v232, %v311
  %v345 = vadd.f32 %v233, %v316
  %v346 = vadd.f32 %v234, %v321
  %v347 = vadd.f32 %v235, %v326
  %v348 = vadd.f32 %v236, %v331
  %v349 = vmax.f32 %v333, 0.0
  %v350 = vmax.f32 %v334, 0.0
  %v351 = vmax.f32 %v335, 0.0
  %v352 = vmax.f32 %v336, 0.0
  %v353 = vmax.f32 %v337, 0.0
  %v354 = vmax.f32 %v338, 0.0
  %v355 = vmax.f32 %v339, 0.0
  %v356 = vmax.f32 %v340, 0.0
  %v357 = vmax.f32 %v341, 0.0
  %v358 = vmax.f32 %v342, 0.0
  %v359 = vmax.f32 %v343, 0.0
  %v360 = vmax.f32 %v344, 0.0
  %v361 = vmax.f32 %v345, 0.0
  %v362 = vmax.f32 %v346, 0.0
  %v363 = vmax.f32 %v347, 0.0
  %v364 = vmax.f32 %v348, 0.0
  %v365 = vld [vmem:[%s3] sm:$0xff]
  %v366 = vld [vmem:[%s4] sm:$0xff]
  %368 = vset.pattern.permute.xlu0 0
  %369 = vperm.xlu0 %368, %v366
  %v370 = vpop.permute.xlu0 %369
  %372 = vmatprep.subr.mxu0 0.0
  %373 = vmatpush1.msra.mxu0 %v349
  %374 = vmatprep.subr.mxu0 0.0
  %375 = vmatpush1.msra.mxu0 %v350
  %376 = vmatprep.subr.mxu0 0.0
  %377 = vmatpush1.msra.mxu0 %v351
  %378 = vmatprep.subr.mxu0 0.0
  %379 = vmatpush1.msra.mxu0 %v352
  %380 = vmatprep.subr.mxu0 0.0
  %381 = vmatpush1.msra.mxu0 %v353
  %382 = vmatprep.subr.mxu0 0.0
  %383 = vmatpush1.msra.mxu0 %v354
  %384 = vmatprep.subr.mxu0 0.0
  %385 = vmatpush1.msra.mxu0 %v355
  %386 = vmatprep.subr.mxu0 0.0
  %387 = vmatpush1.msra.mxu0 %v356
  %388 = vmatprep.subr.mxu0 0.0
  %389 = vmatpush1.msra.mxu0 %v357
  %390 = vmatprep.subr.mxu0 0.0
  %391 = vmatpush1.msra.mxu0 %v358
  %392 = vmatprep.subr.mxu0 0.0
  %393 = vmatpush1.msra.mxu0 %v359
  %394 = vmatprep.subr.mxu0 0.0
  %395 = vmatpush1.msra.mxu0 %v360
  %396 = vmatprep.subr.mxu0 0.0
  %397 = vmatpush1.msra.mxu0 %v361
  %398 = vmatprep.subr.mxu0 0.0
  %399 = vmatpush1.msra.mxu0 %v362
  %400 = vmatprep.subr.mxu0 0.0
  %401 = vmatpush1.msra.mxu0 %v363
  %402 = vmatprep.subr.mxu0 0.0
  %403 = vmatpush1.msra.mxu0 %v364
  %404 = vmatprep.subr.mxu0 0.0
  %405 = vmatpush1.msra.mxu0 0.0
  %406 = vmatprep.subr.mxu0 0.0
  %407 = vmatpush1.msra.mxu0 0.0
  %408 = vmatprep.subr.mxu0 0.0
  %409 = vmatpush1.msra.mxu0 0.0
  %410 = vmatprep.subr.mxu0 0.0
  %411 = vmatpush1.msra.mxu0 0.0
  %412 = vmatprep.subr.mxu0 0.0
  %413 = vmatpush1.msra.mxu0 0.0
  %414 = vmatprep.subr.mxu0 0.0
  %415 = vmatpush1.msra.mxu0 0.0
  %416 = vmatprep.subr.mxu0 0.0
  %417 = vmatpush1.msra.mxu0 0.0
  %418 = vmatprep.subr.mxu0 0.0
  %419 = vmatpush1.msra.mxu0 0.0
  %420 = vmatprep.subr.mxu0 0.0
  %421 = vmatpush1.msra.mxu0 0.0
  %422 = vmatprep.subr.mxu0 0.0
  %423 = vmatpush1.msra.mxu0 0.0
  %424 = vmatprep.subr.mxu0 0.0
  %425 = vmatpush1.msra.mxu0 0.0
  %426 = vmatprep.subr.mxu0 0.0
  %427 = vmatpush1.msra.mxu0 0.0
  %428 = vmatprep.subr.mxu0 0.0
  %429 = vmatpush1.msra.mxu0 0.0
  %430 = vmatprep.subr.mxu0 0.0
  %431 = vmatpush1.msra.mxu0 0.0
  %432 = vmatprep.subr.mxu0 0.0
  %433 = vmatpush1.msra.mxu0 0.0
  %434 = vmatprep.subr.mxu0 0.0
  %435 = vmatpush1.msra.mxu0 0.0
  %436 = vmatprep.mubr.f32.mxu0 0.0
  %437 = vmatmul.mubr.f32.gmra.mrb[0].mxu0 %v365
  %v438 = vpop.f32.mrb[0].mxu0
  %v439 = vadd.f32 %v370, %v438
  %v440 = vpop.f32.mrb[0].mxu0
  %441 = vdwg.mxu0
  %442 = vst [vmem:[%s5] sm:$0xff] %v439
  // Predicated region
  $region22: #{agent_forward.1} parent=0 // pred_check
    _
  $region23: #{agent_forward.1} parent=0 // pred_check_branch
    %444 = sbr.rel (0) target = $region25
  $region24: #{agent_forward.1} parent=0 // pred_region
    _
  $region25: #{agent_forward.1} parent=0 // pred_fallthru
    _
  // Predicated region
  $region26: #{agent_forward.1} parent=0 // pred_check
    _
  $region27: #{agent_forward.1} parent=0 // pred_check_branch
    %446 = sbr.rel (0) target = $region29
  $region28: #{agent_forward.1} parent=0 // pred_region
    _
  $region29: #{agent_forward.1} parent=0 // pred_fallthru
    _

</llo_original>
